<compile_context>
chip_gen: v7x
topology: tpu7x:2x2x1
jax: 0.10.0
libtpu: 0.0.40
codegen_flags: <defaults>
</compile_context>

<pallas_src>
import functools

import numpy as np
import jax
import jax.numpy as jnp
from jax.experimental import pallas as pl
from jax.experimental.pallas import tpu as pltpu

_LIM_VAL = 36.0
_EPS = float(np.finfo(np.float64).resolution)  # 1e-15, matches the torch module
_LANES = 128


def logexp(t):
    """JAX mirror of the torch logexp: eps + softplus with clamp."""
    t = jnp.asarray(t, jnp.float32)
    clamped = jnp.clip(t, -_LIM_VAL, _LIM_VAL)
    return _EPS + jnp.where(t > _LIM_VAL, t, jnp.log(jnp.exp(clamped) + 1.0))


def _round_up(x, m):
    return ((x + m - 1) // m) * m


def _bf16_vector_compute_ok():
    """bf16 VALU/EUP exists on v6e/v7x but not on v5e."""
    try:
        kind = jax.devices()[0].device_kind.lower()
    except Exception:
        return False
    return ("v6" in kind) or ("v7" in kind)


def _warp_kernel(a_ref, b_ref, c_ref, d_ref, y_ref, o_ref, *, compute_dtype):
    """Elementwise hot path.

    a_ref, b_ref, c_ref: SMEM f32[num_terms] (a, b already logexp-transformed; raw c)
    d_ref:               SMEM f32[1]         (already logexp-transformed d)
    y_ref, o_ref:        VMEM (tm, 128) tiles in the caller's native dtype
    compute_dtype:       f32, or bf16 on v6e/v7x when the input is bf16
    """
    y = y_ref[...].astype(compute_dtype)
    s = d_ref[0].astype(compute_dtype) * y
    # num_warping_terms is small and static -> unrolled python loop
    for i in range(a_ref.shape[0]):
        ai = a_ref[i].astype(compute_dtype)
        bi = b_ref[i].astype(compute_dtype)
        ci = c_ref[i].astype(compute_dtype)
        # jnp.tanh lowers to the native EUP tanh op on TPU (1 transcendental/term)
        s = s + ai * jnp.tanh(bi * (y + ci))
    o_ref[...] = s.astype(o_ref.dtype)


def tanh_warping_forward(y, pre_a, pre_b, c, pre_d, *, block_bytes_budget=4 << 20):
    """Apply the TanhWarpingLayer forward pass.

    y:      array of any shape / dtype (f32 or bf16 etc.)
    pre_a, pre_b, c: f32[num_warping_terms]
    pre_d:  f32 scalar (shape () or (1,))
    block_bytes_budget: target bytes per (rows, 128) block (dtype-aware rows).
    """
    orig_shape = y.shape
    orig_dtype = y.dtype
    total = int(np.prod(orig_shape))
    itemsize = int(jnp.dtype(orig_dtype).itemsize)

    # Tiny scalar parameter glue stays in plain JAX (4 + 3*n flops total).
    a = logexp(pre_a)
    b = logexp(pre_b)
    d = logexp(pre_d).reshape(1)
    c = jnp.asarray(c, jnp.float32)
    num_terms = int(a.shape[0])

    # bf16 in-kernel compute on v6e/v7x keeps the bf16 path HBM-bound;
    # v5e (no bf16 VALU/EUP) and f32 inputs compute in f32.
    compute_dtype = (
        jnp.bfloat16
        if (orig_dtype == jnp.bfloat16 and _bf16_vector_compute_ok())
        else jnp.float32
    )

    m_raw = -(-total // _LANES)          # rows of 128 lanes (ceil)
    m8 = _round_up(m_raw, 8)

    # Dtype-aware block rows: ~4 MiB blocks (8192 rows f32, 16384 rows bf16).
    block_rows = max(512, block_bytes_budget // (_LANES * itemsize))
    tm = int(min(block_rows, m8))
    # v7x megacore: guarantee >= ~4 grid steps for arrays above ~1 MiB so the
    # "parallel" grid axis actually shards across both TensorCores.
    if m8 * _LANES * itemsize > (1 << 20):
        tm = min(tm, _round_up(-(-m8 // 4), 8))
    tm = max(int(tm), 8)

    # Only a <128-element lane remainder is ever padded; the row dimension uses
    # Pallas's ragged last block (masked writeback), so no whole-array pad/slice
    # HBM round trips when total is already a multiple of 128.
    flat = y.reshape(-1)
    padded = m_raw * _LANES
    if padded != total:
        flat = jnp.pad(flat, (0, padded - total))
    y2d = flat.reshape(m_raw, _LANES)

    grid = (pl.cdiv(m_raw, tm),)

    # Double-buffered input + output blocks plus slack; well under every
    # generation's scoped-VMEM budget (v7x: 64 MiB/TC).
    block_bytes = tm * _LANES * itemsize
    vmem_limit = int(min(max(4 * block_bytes + (2 << 20), 4 << 20), 64 << 20))

    cost = pl.CostEstimate(
        flops=(1 + 4 * num_terms) * total,
        transcendentals=num_terms * total,
        bytes_accessed=2 * total * itemsize,
    )

    kernel = functools.partial(_warp_kernel, compute_dtype=compute_dtype)

    out = pl.pallas_call(
        kernel,
        out_shape=jax.ShapeDtypeStruct((m_raw, _LANES), orig_dtype),
        grid_spec=pltpu.PrefetchScalarGridSpec(
            num_scalar_prefetch=4,                       # a, b, c, d land in SMEM
            grid=grid,
            in_specs=[
                pl.BlockSpec((tm, _LANES), lambda i, a_s, b_s, c_s, d_s: (i, 0)),
            ],
            out_specs=pl.BlockSpec((tm, _LANES), lambda i, a_s, b_s, c_s, d_s: (i, 0)),
        ),
        compiler_params=pltpu.CompilerParams(
            dimension_semantics=("parallel",),
            vmem_limit_bytes=vmem_limit,
        ),
        cost_estimate=cost,
    )(a, b, c, d, y2d)

    out_flat = out.reshape(-1)
    if padded != total:
        out_flat = out_flat[:total]
    return out_flat.reshape(orig_shape)


def _reference_forward(y, pre_a, pre_b, c, pre_d):
    """Pure-JAX reference mirroring the torch module's forward (f32 compute)."""
    a = logexp(pre_a)
    b = logexp(pre_b)
    d = logexp(pre_d)
    yf = y.astype(jnp.float32)
    s = d * yf
    for i in range(pre_a.shape[0]):
        s = s + a[i] * jnp.tanh(b[i] * (yf + c[i]))
    return s


if __name__ == "__main__":
    NUM_WARPING_TERMS = 3

    key = jax.random.PRNGKey(0)
    k_y, k_a, k_b, k_c, k_d, k_y2, k_y3 = jax.random.split(key, 7)

    # deterministic parameter init mimicking reset_parameters():
    #   pre_a, pre_b ~ |N(0,1)|,  c ~ U(-0.5, 0.5),  pre_d ~ |N(0,1)|
    pre_a = jnp.abs(jax.random.normal(k_a, (NUM_WARPING_TERMS,), jnp.float32))
    pre_b = jnp.abs(jax.random.normal(k_b, (NUM_WARPING_TERMS,), jnp.float32))
    c = jax.random.uniform(k_c, (NUM_WARPING_TERMS,), jnp.float32, -0.5, 0.5)
    pre_d = jnp.abs(jax.random.normal(k_d, (1,), jnp.float32))

    # 1) standard NCHW f32 input (divides evenly into 128-lane rows, single block)
    y = jax.random.normal(k_y, (2, 4, 16, 16), jnp.float32)
    out = jax.block_until_ready(tanh_warping_forward(y, pre_a, pre_b, c, pre_d))
    ref = _reference_forward(y, pre_a, pre_b, c, pre_d)
    np.testing.assert_allclose(np.asarray(out), np.asarray(ref), rtol=1e-5, atol=1e-5)

    # 2) awkward shape (not a multiple of 128) -> exercises the small lane-pad
    #    plus ragged-last-block path
    y_odd = jax.random.normal(k_y2, (3, 5, 7, 11), jnp.float32)
    out_odd = jax.block_until_ready(tanh_warping_forward(y_odd, pre_a, pre_b, c, pre_d))
    ref_odd = _reference_forward(y_odd, pre_a, pre_b, c, pre_d)
    np.testing.assert_allclose(np.asarray(out_odd), np.asarray(ref_odd), rtol=1e-5, atol=1e-5)

    # 3) larger f32 input -> exercises the multi-step grid (>=4 blocks) path
    y_big = jax.random.normal(k_y3, (8, 32, 64, 64), jnp.float32)
    out_big = jax.block_until_ready(tanh_warping_forward(y_big, pre_a, pre_b, c, pre_d))
    ref_big = _reference_forward(y_big, pre_a, pre_b, c, pre_d)
    np.testing.assert_allclose(np.asarray(out_big), np.asarray(ref_big), rtol=1e-5, atol=1e-5)

    # 4) bf16 input -> native-dtype DMA; bf16 in-kernel compute on v6e/v7x
    #    (slightly looser tolerance for the low-precision compute path), f32 on v5e
    y_bf16 = y.astype(jnp.bfloat16)
    out_bf16 = jax.block_until_ready(tanh_warping_forward(y_bf16, pre_a, pre_b, c, pre_d))
    assert out_bf16.dtype == jnp.bfloat16
    ref_bf16 = _reference_forward(y_bf16, pre_a, pre_b, c, pre_d)
    np.testing.assert_allclose(
        np.asarray(out_bf16, dtype=np.float32), np.asarray(ref_bf16), rtol=3e-2, atol=3e-2
    )

    print("KERNEL_OK")
</pallas_src>

<mosaic_0001>
module attributes {stable_mosaic.version = 11 : i64} {
  func.func @_warp_kernel(%arg0: i32, %arg1: memref<3xf32, #tpu.memory_space<smem>>, %arg2: memref<3xf32, #tpu.memory_space<smem>>, %arg3: memref<3xf32, #tpu.memory_space<smem>>, %arg4: memref<1xf32, #tpu.memory_space<smem>>, %arg5: memref<16x128xf32, #tpu.memory_space<vmem>>, %arg6: memref<16x128xf32, #tpu.memory_space<vmem>>) attributes {dimension_semantics = [#tpu.dimension_semantics<parallel>], iteration_bounds = array<i64: 1>, scalar_prefetch = 4 : i64, scratch_operands = 0 : i64, tpu.core_type = #tpu.core_type<tc>, window_params = [{transform_indices = @transform_0, window_bounds = array<i64: 16, 128>}, {transform_indices = @transform_1, window_bounds = array<i64: 16, 128>}]} {
    %c0 = arith.constant 0 : index
    %c0_0 = arith.constant 0 : index
    %0 = vector.load %arg5[%c0, %c0_0] : memref<16x128xf32, #tpu.memory_space<vmem>>, vector<16x128xf32>
    %c0_1 = arith.constant 0 : index
    %1 = memref.load %arg4[%c0_1] : memref<1xf32, #tpu.memory_space<smem>>
    %2 = vector.broadcast %1 : f32 to vector<16x128xf32>
    %3 = arith.mulf %2, %0 : vector<16x128xf32>
    %c0_2 = arith.constant 0 : index
    %4 = memref.load %arg1[%c0_2] : memref<3xf32, #tpu.memory_space<smem>>
    %c0_3 = arith.constant 0 : index
    %5 = memref.load %arg2[%c0_3] : memref<3xf32, #tpu.memory_space<smem>>
    %c0_4 = arith.constant 0 : index
    %6 = memref.load %arg3[%c0_4] : memref<3xf32, #tpu.memory_space<smem>>
    %7 = vector.broadcast %6 : f32 to vector<16x128xf32>
    %8 = arith.addf %0, %7 : vector<16x128xf32>
    %9 = vector.broadcast %5 : f32 to vector<16x128xf32>
    %10 = arith.mulf %9, %8 : vector<16x128xf32>
    %11 = math.tanh %10 : vector<16x128xf32>
    %12 = vector.broadcast %4 : f32 to vector<16x128xf32>
    %13 = arith.mulf %12, %11 : vector<16x128xf32>
    %14 = arith.addf %3, %13 : vector<16x128xf32>
    %c1 = arith.constant 1 : index
    %15 = memref.load %arg1[%c1] : memref<3xf32, #tpu.memory_space<smem>>
    %c1_5 = arith.constant 1 : index
    %16 = memref.load %arg2[%c1_5] : memref<3xf32, #tpu.memory_space<smem>>
    %c1_6 = arith.constant 1 : index
    %17 = memref.load %arg3[%c1_6] : memref<3xf32, #tpu.memory_space<smem>>
    %18 = vector.broadcast %17 : f32 to vector<16x128xf32>
    %19 = arith.addf %0, %18 : vector<16x128xf32>
    %20 = vector.broadcast %16 : f32 to vector<16x128xf32>
    %21 = arith.mulf %20, %19 : vector<16x128xf32>
    %22 = math.tanh %21 : vector<16x128xf32>
    %23 = vector.broadcast %15 : f32 to vector<16x128xf32>
    %24 = arith.mulf %23, %22 : vector<16x128xf32>
    %25 = arith.addf %14, %24 : vector<16x128xf32>
    %c2 = arith.constant 2 : index
    %26 = memref.load %arg1[%c2] : memref<3xf32, #tpu.memory_space<smem>>
    %c2_7 = arith.constant 2 : index
    %27 = memref.load %arg2[%c2_7] : memref<3xf32, #tpu.memory_space<smem>>
    %c2_8 = arith.constant 2 : index
    %28 = memref.load %arg3[%c2_8] : memref<3xf32, #tpu.memory_space<smem>>
    %29 = vector.broadcast %28 : f32 to vector<16x128xf32>
    %30 = arith.addf %0, %29 : vector<16x128xf32>
    %31 = vector.broadcast %27 : f32 to vector<16x128xf32>
    %32 = arith.mulf %31, %30 : vector<16x128xf32>
    %33 = math.tanh %32 : vector<16x128xf32>
    %34 = vector.broadcast %26 : f32 to vector<16x128xf32>
    %35 = arith.mulf %34, %33 : vector<16x128xf32>
    %36 = arith.addf %25, %35 : vector<16x128xf32>
    %c0_9 = arith.constant 0 : index
    %c0_10 = arith.constant 0 : index
    %37 = vector.load %arg6[%c0_9, %c0_10] : memref<16x128xf32, #tpu.memory_space<vmem>>, vector<16x128xf32>
    tpu.vector_store %arg6[%c0_9, %c0_10], %36 {strides = array<i32>} : memref<16x128xf32, #tpu.memory_space<vmem>>, vector<16x128xf32>,
    return
  }
  func.func @transform_0(%arg0: i32, %arg1: memref<3xf32, #tpu.memory_space<smem>>, %arg2: memref<3xf32, #tpu.memory_space<smem>>, %arg3: memref<3xf32, #tpu.memory_space<smem>>, %arg4: memref<1xf32, #tpu.memory_space<smem>>) -> (i32, i32) {
    %c0_i32 = arith.constant 0 : i32
    %c0_i32_0 = arith.constant 0 : i32
    return %arg0, %c0_i32 : i32, i32
  }
  func.func @transform_1(%arg0: i32, %arg1: memref<3xf32, #tpu.memory_space<smem>>, %arg2: memref<3xf32, #tpu.memory_space<smem>>, %arg3: memref<3xf32, #tpu.memory_space<smem>>, %arg4: memref<1xf32, #tpu.memory_space<smem>>) -> (i32, i32) {
    %c0_i32 = arith.constant 0 : i32
    %c0_i32_0 = arith.constant 0 : i32
    return %arg0, %c0_i32 : i32, i32
  }
}

</mosaic_0001>

<llo_original>
// kernel: tpu_custom_call.1
$region0: #{tpu_custom_call.1}
  #allocation0 [shape = 'u32[]', space=smem, size = 0x4, offset = 0x4, fixed_abs, tag = 'smem constant byte address 0x4 - core index']
  #allocation1 [shape = 'u32[144,128]{1,0:T(1,128)}', space=vmem, size = 0x12000, scoped, tag = 'internal scratch']
  #allocation2 [shape = 's32[1]{0}', space=sflag, size = 0x4, scoped, tag = 'scoped memory for tpu_custom_call.1']
  #allocation3 [shape = 'u8[512]{0}', space=smem, size = 0x200, scoped, tag = 'prefetched SMEM operand 0']
  #allocation4 [shape = 'u8[512]{0}', space=smem, size = 0x200, scoped, tag = 'prefetched SMEM operand 1']
  #allocation5 [shape = 'u8[512]{0}', space=smem, size = 0x200, scoped, tag = 'prefetched SMEM operand 2']
  #allocation6 [shape = 'f32[1]{0:T(128)S(6)}', space=smem, size = 0x200, scoped, tag = 'prefetched SMEM operand 3']
  %s0 = inlined_call_operand.vmem [shape: f32[3], index: 0, kind: input, shape index: {}]
  %s1 = inlined_call_operand.vmem [shape: f32[3], index: 1, kind: input, shape index: {}]
  %s2 = inlined_call_operand.vmem [shape: f32[3], index: 2, kind: input, shape index: {}]
  %s3 = inlined_call_operand.<no memory space> [shape: f32[1], index: 3, kind: input, shape index: {}]
  %s4 = inlined_call_operand.hbm [shape: f32[16,128], index: 4, kind: input, shape index: {}]
  %s5 = inlined_call_operand.hbm [shape: f32[16,128], index: 5, kind: output, shape index: {}]
  %s6 = sld [smem:[#allocation0]]
  $region18: #{tpu_custom_call.1} parent=0
    _
  %s8 = ssub.s32 1, %s6
  %s9 = scalar_select 0, %s8, %s6
  %s10 = sshll.u32 %s0, 4
  %s11 = int_to_ptr.vmem [resolvable:$true] %s10
  %13 = dma.vmem_to_smem %s11, 16, [#allocation3], [#allocation2]
  %s14 = sshll.u32 %s1, 4
  %s15 = int_to_ptr.vmem [resolvable:$true] %s14
  %17 = dma.vmem_to_smem %s15, 16, [#allocation4], [#allocation2]
  %s18 = sshll.u32 %s2, 4
  %s19 = int_to_ptr.vmem [resolvable:$true] %s18
  %21 = dma.vmem_to_smem %s19, 16, [#allocation5], [#allocation2]
  %22 = sst [smem:[#allocation6]] %s3
  %23 = dma.done [#allocation2], 48
  %24 = sfence
  $region1: #{tpu_custom_call.1} parent=0
    #allocation7 [shape = 'u8[8192]{0}', space=vmem, size = 0x2000, scoped, tag = 'input window, operand 4, single buffered']
    #allocation8 [shape = 's32[1]{0}', space=sflag, size = 0x4, scoped, tag = 'scoped memory for tpu_custom_call.1']
    #allocation9 [shape = 's32[1]{0}', space=sflag, size = 0x4, scoped, tag = 'scoped memory for tpu_custom_call.1']
    #allocation10 [shape = 'u8[8192]{0}', space=vmem, size = 0x2000, scoped, tag = 'output window, operand 0, single buffered']
    %25 = vsyncpa [#allocation8], 0
    %26 = vsyncpa [#allocation9], 0
    // Predicated region
    $region2: #{tpu_custom_call.1} parent=1 // pred_check
      _
    $region3: #{tpu_custom_call.1} parent=1 // pred_check_branch
      %28 = sbr.rel (0) target = $region5
    $region4: #{tpu_custom_call.1} parent=1 // pred_region
      %s30 = ssub.s32 256, 256
      %31 = vsyncadd [#allocation8], %s30
      %s32 = sshll.u32 [#allocation7], 4
      %s33 = int_to_ptr.vmem [resolvable:$true] %s32
      %38 = dma.hbm_to_vmem [thread:$0]  %s4, 256, %s33, [#allocation8], 128, 128, 8
    $region5: #{tpu_custom_call.1} parent=1 // pred_fallthru
      _
    // Predicated region
    $region6: #{tpu_custom_call.1} parent=1 // pred_check
      _
    $region7: #{tpu_custom_call.1} parent=1 // pred_check_branch
      %40 = sbr.rel (0) target = $region9
    $region8: #{tpu_custom_call.1} parent=1 // pred_region
      %41 = dma.done [#allocation8], 256
    $region9: #{tpu_custom_call.1} parent=1 // pred_fallthru
      _
    %v42 = vld [vmem:[#allocation7] sm:$0xff]
    %v43 = vld [vmem:[#allocation7 + $0x8] sm:$0xff]
    %s44 = sld [smem:[#allocation6]]
    %v45 = vstv %s44
    %v46 = vmul.f32 %v45, %v42
    %v47 = vmul.f32 %v45, %v43
    %s48 = sld [smem:[#allocation3]]
    %s49 = sld [smem:[#allocation4]]
    %s50 = sld [smem:[#allocation5]]
    %v51 = vstv %s50
    %v52 = vadd.f32 %v42, %v51
    %v53 = vadd.f32 %v43, %v51
    %v54 = vstv %s49
    %v55 = vmul.f32 %v54, %v52
    %v56 = vmul.f32 %v54, %v53
    %v57 = vtanh.pop %v55
    %v58 = vtanh.pop %v56
    %v59 = vstv %s48
    %v60 = vmul.f32 %v59, %v57
    %v61 = vmul.f32 %v59, %v58
    %v62 = vadd.f32 %v46, %v60
    %v63 = vadd.f32 %v47, %v61
    %s64 = sld [smem:[#allocation3 + $0x1]]
    %s65 = sld [smem:[#allocation4 + $0x1]]
    %s66 = sld [smem:[#allocation5 + $0x1]]
    %v67 = vstv %s66
    %v68 = vadd.f32 %v42, %v67
    %v69 = vadd.f32 %v43, %v67
    %v70 = vstv %s65
    %v71 = vmul.f32 %v70, %v68
    %v72 = vmul.f32 %v70, %v69
    %v73 = vtanh.pop %v71
    %v74 = vtanh.pop %v72
    %v75 = vstv %s64
    %v76 = vmul.f32 %v75, %v73
    %v77 = vmul.f32 %v75, %v74
    %v78 = vadd.f32 %v62, %v76
    %v79 = vadd.f32 %v63, %v77
    %s80 = sld [smem:[#allocation3 + $0x2]]
    %s81 = sld [smem:[#allocation4 + $0x2]]
    %s82 = sld [smem:[#allocation5 + $0x2]]
    %v83 = vstv %s82
    %v84 = vadd.f32 %v42, %v83
    %v85 = vadd.f32 %v43, %v83
    %v86 = vstv %s81
    %v87 = vmul.f32 %v86, %v84
    %v88 = vmul.f32 %v86, %v85
    %v89 = vtanh.pop %v87
    %v90 = vtanh.pop %v88
    %v91 = vstv %s80
    %v92 = vmul.f32 %v91, %v89
    %v93 = vmul.f32 %v91, %v90
    %v94 = vadd.f32 %v78, %v92
    %v95 = vadd.f32 %v79, %v93
    %96 = vst [vmem:[#allocation10] sm:$0xff] %v94
    %97 = vst [vmem:[#allocation10 + $0x8] sm:$0xff] %v95
    // Predicated region
    $region10: #{tpu_custom_call.1} parent=1 // pred_check
      _
    $region11: #{tpu_custom_call.1} parent=1 // pred_check_branch
      %99 = sbr.rel (0) target = $region13
    $region12: #{tpu_custom_call.1} parent=1 // pred_region
      %s101 = ssub.s32 256, 256
      %102 = vsyncadd [#allocation9], %s101
      %s103 = sshll.u32 [#allocation10], 4
      %s104 = int_to_ptr.vmem [resolvable:$true] %s103
      %109 = dma.vmem_to_hbm [thread:$0]  %s104, 256, %s5, [#allocation9], 128, 128, 8
    $region13: #{tpu_custom_call.1} parent=1 // pred_fallthru
      _
    // Predicated region
    $region14: #{tpu_custom_call.1} parent=1 // pred_check
      _
    $region15: #{tpu_custom_call.1} parent=1 // pred_check_branch
      %111 = sbr.rel (0) target = $region17
    $region16: #{tpu_custom_call.1} parent=1 // pred_region
      %112 = dma.done [#allocation9], 256
    $region17: #{tpu_custom_call.1} parent=1 // pred_fallthru
      _
    %113 = vsyncpa [#allocation8], 1
    %114 = vsyncpa [#allocation9], 1

</llo_original>
